<compile_context>
chip_gen: v7x
topology: tpu7x:2x2x1
jax: 0.10.0
libtpu: 0.0.40
codegen_flags: <defaults>
</compile_context>

<pallas_src>
import functools
import math

import jax
import jax.numpy as jnp
from jax.experimental import pallas as pl
from jax.experimental.pallas import tpu as pltpu


def attention_head_kernel(q_ref, k_ref, v_ref,
                          wq_ref, bq_ref, wk_ref, bk_ref, wv_ref, bv_ref,
                          o_ref, *, scale, matmul_dtype):
    """One grid step processes a (block_b, S) slab of the batch.

    q/k/v_ref: (Bt, S, dim_in)   activations for this batch tile
    w*_ref:    (dim_in, d)       dense projection weights (no padding)
    b*_ref:    (1, d)            projection biases
    o_ref:     (Bt, S, dim_k)    attention output
    """
    bt, s, din = q_ref.shape
    mm = matmul_dtype

    def project(x_ref, w_ref, b_ref):
        d = w_ref.shape[1]
        # 2-D MXU matmul with f32 accumulation.  For f32 operands the
        # (bt*s, din) reshape is a layout no-op as long as S is a multiple of
        # the 8-row sublane tile (S=8 here); keep S a multiple of 16 if bf16
        # operands are enabled.
        x2 = x_ref[...].reshape(bt * s, din).astype(mm)
        y = jnp.dot(x2, w_ref[...].astype(mm),
                    preferred_element_type=jnp.float32)
        y = y + b_ref[...].astype(jnp.float32)
        return y.reshape(bt, s, d)

    q = project(q_ref, wq_ref, bq_ref) * scale   # scale Q, not (S,S) scores
    k = project(k_ref, wk_ref, bk_ref)
    v = project(v_ref, wv_ref, bv_ref)

    # scores = Q K^T via a batched minor-dim contraction (no transpose).
    scores = jnp.einsum("bqd,bkd->bqk", q.astype(mm), k.astype(mm),
                        preferred_element_type=jnp.float32)

    # Numerically stable softmax along the key axis; stats stay in f32.
    m = jnp.max(scores, axis=-1, keepdims=True)
    e = jnp.exp(scores - m)
    p = e / jnp.sum(e, axis=-1, keepdims=True)   # exact divide (correctness)

    out = jnp.einsum("bqk,bkd->bqd", p.astype(mm), v.astype(mm),
                     preferred_element_type=jnp.float32)
    o_ref[...] = out.astype(o_ref.dtype)


def _tpu_hw():
    """(tensorcores_per_chip, vmem_bytes) with safe fallbacks."""
    cores, vmem = 1, 64 << 20
    try:
        info = pltpu.get_tpu_info()
        vmem = int(getattr(info, "vmem_capacity_bytes", vmem))
        for name in ("num_tensorcores", "tensorcore_count", "num_cores",
                     "cores_per_chip"):
            val = getattr(info, name, None)
            if isinstance(val, int) and val > 0:
                cores = val
                break
    except Exception:
        pass  # interpret mode / unknown chip: conservative defaults
    return cores, vmem


def _choose_block_b(B, S, dim_in, dim_k, cores, vmem_budget):
    """Largest batch tile that fits the VMEM budget and keeps the pipeline fed."""
    itemsize = 4  # budget in f32 even if matmul operands are bf16
    # Per-batch-element live bytes: double-buffered q/k/v + out tiles, the
    # projected Q/K/V, and the (S, S) scores; x2 slack for compiler temps.
    per_b = S * (2 * 3 * dim_in + 3 * dim_k + S + 2 * dim_k) * itemsize * 2
    max_bb = max(1, vmem_budget // per_b)
    divisors = [d for d in range(1, B + 1) if B % d == 0]

    if B * per_b <= vmem_budget and B <= 4 * cores:
        target_steps = min(B, cores)        # tiny problem: one step per core
    else:
        target_steps = min(B, 4 * cores)    # >= 4 steps/core for DMA overlap

    fitting = [d for d in divisors if d <= max_bb]
    good = [d for d in fitting if B // d >= target_steps]
    if good:
        return max(good)
    return max(fitting) if fitting else 1


def attention_head(query, key, value, wq, bq, wk, bk, wv, bv,
                   *, block_b=None, matmul_dtype=jnp.float32):
    B, S, dim_in = query.shape
    dim_q = wq.shape[1]
    dim_k = wk.shape[1]
    assert wv.shape[1] == dim_k, "v projection width must equal k projection width"
    # Q @ K^T requires matching projection widths (same constraint as torch.bmm).
    assert dim_q == dim_k, "dim_q must equal dim_k for Q @ K^T"

    cores, vmem = _tpu_hw()
    # Tiling budget ~ a quarter of physical VMEM; scoped limit ~ half, capped.
    vmem_budget = max(8 << 20, min(vmem // 4, 32 << 20))
    vmem_limit = int(max(16 << 20, min(vmem // 2, 64 << 20)))

    if block_b is None:
        block_b = _choose_block_b(B, S, dim_in, dim_k, cores, vmem_budget)
    assert B % block_b == 0, "block_b must divide the batch"
    grid = (B // block_b,)

    x_spec = pl.BlockSpec((block_b, S, dim_in), lambda b: (b, 0, 0))
    # Weights / biases are tiny and constant across the grid.  (On v7x one
    # could additionally single-buffer them via pipeline_mode=pl.Buffered(1);
    # at ~2 KiB each it is not worth the extra constraint here.)
    wq_spec = pl.BlockSpec((dim_in, dim_q), lambda b: (0, 0))
    wk_spec = pl.BlockSpec((dim_in, dim_k), lambda b: (0, 0))
    wv_spec = pl.BlockSpec((dim_in, dim_k), lambda b: (0, 0))
    bq_spec = pl.BlockSpec((1, dim_q), lambda b: (0, 0))
    bk_spec = pl.BlockSpec((1, dim_k), lambda b: (0, 0))
    bv_spec = pl.BlockSpec((1, dim_k), lambda b: (0, 0))
    o_spec = pl.BlockSpec((block_b, S, dim_k), lambda b: (b, 0, 0))

    scale = 1.0 / math.sqrt(float(dim_q))
    kernel = functools.partial(attention_head_kernel, scale=scale,
                               matmul_dtype=matmul_dtype)

    return pl.pallas_call(
        kernel,
        out_shape=jax.ShapeDtypeStruct((B, S, dim_k), query.dtype),
        grid_spec=pltpu.PrefetchScalarGridSpec(
            num_scalar_prefetch=0,
            grid=grid,
            in_specs=[x_spec, x_spec, x_spec,
                      wq_spec, bq_spec, wk_spec, bk_spec, wv_spec, bv_spec],
            out_specs=o_spec,
        ),
        compiler_params=pltpu.CompilerParams(
            dimension_semantics=("parallel",),
            vmem_limit_bytes=vmem_limit,
        ),
    )(query, key, value, wq, bq, wk, bk, wv, bv)


def reference(query, key, value, wq, bq, wk, bk, wv, bv):
    hp = jax.lax.Precision.HIGHEST
    Q = jnp.einsum("bsn,nd->bsd", query, wq, precision=hp) + bq
    K = jnp.einsum("bsn,nd->bsd", key, wk, precision=hp) + bk
    V = jnp.einsum("bsn,nd->bsd", value, wv, precision=hp) + bv
    scores = jnp.einsum("bqd,bkd->bqk", Q, K, precision=hp) / (Q.shape[-1] ** 0.5)
    p = jax.nn.softmax(scores, axis=-1)
    return jnp.einsum("bqk,bkd->bqd", p, V, precision=hp)


if __name__ == "__main__":
    # Small shapes consistent with the module's forward:
    #   query/key/value: (B, S, dim_in); dim_q must equal dim_k for Q @ K^T.
    B, S, dim_in, dim_q, dim_k = 2, 8, 32, 16, 16

    key0 = jax.random.PRNGKey(0)
    k1, k2, k3, k4, k5, k6, k7, k8, k9 = jax.random.split(key0, 9)

    query = jax.random.normal(k1, (B, S, dim_in), dtype=jnp.float32)
    key_t = jax.random.normal(k2, (B, S, dim_in), dtype=jnp.float32)
    value = jax.random.normal(k3, (B, S, dim_in), dtype=jnp.float32)

    # Deterministic parameter init (nn.Linear-shaped, stored transposed).
    init = 1.0 / math.sqrt(dim_in)
    wq = jax.random.uniform(k4, (dim_in, dim_q), minval=-init, maxval=init, dtype=jnp.float32)
    bq = jax.random.uniform(k5, (1, dim_q), minval=-init, maxval=init, dtype=jnp.float32)
    wk = jax.random.uniform(k6, (dim_in, dim_k), minval=-init, maxval=init, dtype=jnp.float32)
    bk = jax.random.uniform(k7, (1, dim_k), minval=-init, maxval=init, dtype=jnp.float32)
    wv = jax.random.uniform(k8, (dim_in, dim_k), minval=-init, maxval=init, dtype=jnp.float32)
    bv = jax.random.uniform(k9, (1, dim_k), minval=-init, maxval=init, dtype=jnp.float32)

    out = attention_head(query, key_t, value, wq, bq, wk, bk, wv, bv)
    out = jax.block_until_ready(out)

    ref = reference(query, key_t, value, wq, bq, wk, bk, wv, bv)
    assert out.shape == (B, S, dim_k)
    # Kernel math is f32 with f32 accumulation and an exact softmax divide; the
    # tolerance additionally covers default-precision (bf16-pass) matmul
    # lowering that XLA may use when the kernel body is interpreted.
    assert jnp.allclose(out, ref, atol=1e-2, rtol=1e-2), "mismatch vs JAX reference"

    print("KERNEL_OK")
</pallas_src>

<mosaic_0001>
module attributes {stable_mosaic.version = 11 : i64} {
  func.func @attention_head_kernel(%arg0: i32, %arg1: memref<2x8x32xf32, #tpu.memory_space<vmem>>, %arg2: memref<2x8x32xf32, #tpu.memory_space<vmem>>, %arg3: memref<2x8x32xf32, #tpu.memory_space<vmem>>, %arg4: memref<32x16xf32, #tpu.memory_space<vmem>>, %arg5: memref<1x16xf32, #tpu.memory_space<vmem>>, %arg6: memref<32x16xf32, #tpu.memory_space<vmem>>, %arg7: memref<1x16xf32, #tpu.memory_space<vmem>>, %arg8: memref<32x16xf32, #tpu.memory_space<vmem>>, %arg9: memref<1x16xf32, #tpu.memory_space<vmem>>, %arg10: memref<2x8x16xf32, #tpu.memory_space<vmem>>) attributes {dimension_semantics = [#tpu.dimension_semantics<parallel>], iteration_bounds = array<i64: 1>, scalar_prefetch = 0 : i64, scratch_operands = 0 : i64, tpu.core_type = #tpu.core_type<tc>, window_params = [{transform_indices = @transform_0, window_bounds = array<i64: 2, 8, 32>}, {transform_indices = @transform_1, window_bounds = array<i64: 2, 8, 32>}, {transform_indices = @transform_2, window_bounds = array<i64: 2, 8, 32>}, {pipeline_mode = #tpu.pipeline_mode<synchronous>, transform_indices = @transform_3, window_bounds = array<i64: 32, 16>}, {pipeline_mode = #tpu.pipeline_mode<synchronous>, transform_indices = @transform_4, window_bounds = array<i64: 1, 16>}, {pipeline_mode = #tpu.pipeline_mode<synchronous>, transform_indices = @transform_5, window_bounds = array<i64: 32, 16>}, {pipeline_mode = #tpu.pipeline_mode<synchronous>, transform_indices = @transform_6, window_bounds = array<i64: 1, 16>}, {pipeline_mode = #tpu.pipeline_mode<synchronous>, transform_indices = @transform_7, window_bounds = array<i64: 32, 16>}, {pipeline_mode = #tpu.pipeline_mode<synchronous>, transform_indices = @transform_8, window_bounds = array<i64: 1, 16>}, {transform_indices = @transform_9, window_bounds = array<i64: 2, 8, 16>}]} {
    %c0 = arith.constant 0 : index
    %c0_0 = arith.constant 0 : index
    %c0_1 = arith.constant 0 : index
    %0 = vector.load %arg1[%c0, %c0_0, %c0_1] : memref<2x8x32xf32, #tpu.memory_space<vmem>>, vector<2x8x32xf32>
    %1 = vector.shape_cast %0 : vector<2x8x32xf32> to vector<16x32xf32>
    %c0_2 = arith.constant 0 : index
    %c0_3 = arith.constant 0 : index
    %2 = vector.load %arg4[%c0_2, %c0_3] : memref<32x16xf32, #tpu.memory_space<vmem>>, vector<32x16xf32>
    %cst = arith.constant dense<0.000000e+00> : vector<16x16xf32>
    %3 = tpu.matmul %1, %2, %cst {dimension_numbers = #tpu.dot_dimension_numbers<[1], [0], [0], [1], [0, 0, 1, 1], [], []>} : vector<16x32xf32>, vector<32x16xf32>, vector<16x16xf32> -> vector<16x16xf32>
    %c0_4 = arith.constant 0 : index
    %c0_5 = arith.constant 0 : index
    %4 = vector.load %arg5[%c0_4, %c0_5] : memref<1x16xf32, #tpu.memory_space<vmem>>, vector<1x16xf32>
    %5 = vector.broadcast %4 : vector<1x16xf32> to vector<16x16xf32>
    %6 = arith.addf %3, %5 : vector<16x16xf32>
    %7 = vector.shape_cast %6 : vector<16x16xf32> to vector<2x8x16xf32>
    %cst_6 = arith.constant 2.500000e-01 : f32
    %8 = vector.broadcast %cst_6 : f32 to vector<2x8x16xf32>
    %9 = arith.mulf %7, %8 : vector<2x8x16xf32>
    %c0_7 = arith.constant 0 : index
    %c0_8 = arith.constant 0 : index
    %c0_9 = arith.constant 0 : index
    %10 = vector.load %arg2[%c0_7, %c0_8, %c0_9] : memref<2x8x32xf32, #tpu.memory_space<vmem>>, vector<2x8x32xf32>
    %11 = vector.shape_cast %10 : vector<2x8x32xf32> to vector<16x32xf32>
    %c0_10 = arith.constant 0 : index
    %c0_11 = arith.constant 0 : index
    %12 = vector.load %arg6[%c0_10, %c0_11] : memref<32x16xf32, #tpu.memory_space<vmem>>, vector<32x16xf32>
    %cst_12 = arith.constant dense<0.000000e+00> : vector<16x16xf32>
    %13 = tpu.matmul %11, %12, %cst_12 {dimension_numbers = #tpu.dot_dimension_numbers<[1], [0], [0], [1], [0, 0, 1, 1], [], []>} : vector<16x32xf32>, vector<32x16xf32>, vector<16x16xf32> -> vector<16x16xf32>
    %c0_13 = arith.constant 0 : index
    %c0_14 = arith.constant 0 : index
    %14 = vector.load %arg7[%c0_13, %c0_14] : memref<1x16xf32, #tpu.memory_space<vmem>>, vector<1x16xf32>
    %15 = vector.broadcast %14 : vector<1x16xf32> to vector<16x16xf32>
    %16 = arith.addf %13, %15 : vector<16x16xf32>
    %17 = vector.shape_cast %16 : vector<16x16xf32> to vector<2x8x16xf32>
    %c0_15 = arith.constant 0 : index
    %c0_16 = arith.constant 0 : index
    %c0_17 = arith.constant 0 : index
    %18 = vector.load %arg3[%c0_15, %c0_16, %c0_17] : memref<2x8x32xf32, #tpu.memory_space<vmem>>, vector<2x8x32xf32>
    %19 = vector.shape_cast %18 : vector<2x8x32xf32> to vector<16x32xf32>
    %c0_18 = arith.constant 0 : index
    %c0_19 = arith.constant 0 : index
    %20 = vector.load %arg8[%c0_18, %c0_19] : memref<32x16xf32, #tpu.memory_space<vmem>>, vector<32x16xf32>
    %cst_20 = arith.constant dense<0.000000e+00> : vector<16x16xf32>
    %21 = tpu.matmul %19, %20, %cst_20 {dimension_numbers = #tpu.dot_dimension_numbers<[1], [0], [0], [1], [0, 0, 1, 1], [], []>} : vector<16x32xf32>, vector<32x16xf32>, vector<16x16xf32> -> vector<16x16xf32>
    %c0_21 = arith.constant 0 : index
    %c0_22 = arith.constant 0 : index
    %22 = vector.load %arg9[%c0_21, %c0_22] : memref<1x16xf32, #tpu.memory_space<vmem>>, vector<1x16xf32>
    %23 = vector.broadcast %22 : vector<1x16xf32> to vector<16x16xf32>
    %24 = arith.addf %21, %23 : vector<16x16xf32>
    %25 = vector.shape_cast %24 : vector<16x16xf32> to vector<2x8x16xf32>
    "tpu.trace_start"() <{level = 10 : i32, message = "bqd,bkd->bqk"}> : () -> ()
    %cst_23 = arith.constant dense<0.000000e+00> : vector<2x8x8xf32>
    %26 = tpu.matmul %9, %17, %cst_23 {dimension_numbers = #tpu.dot_dimension_numbers<[2], [2], [1], [1], [0, 0, 0, 1, 1, 1], [0], [0]>} : vector<2x8x16xf32>, vector<2x8x16xf32>, vector<2x8x8xf32> -> vector<2x8x8xf32>
    "tpu.trace_stop"() : () -> ()
    %cst_24 = arith.constant dense<0xFF800000> : vector<2x8xf32>
    %27 = vector.multi_reduction <maximumf>, %26, %cst_24 [2] : vector<2x8x8xf32> to vector<2x8xf32>
    %28 = vector.shape_cast %27 : vector<2x8xf32> to vector<2x8x1xf32>
    %29 = vector.broadcast %28 : vector<2x8x1xf32> to vector<2x8x8xf32>
    %30 = arith.subf %26, %29 : vector<2x8x8xf32>
    %31 = math.exp %30 : vector<2x8x8xf32>
    %cst_25 = arith.constant dense<0.000000e+00> : vector<2x8xf32>
    %32 = vector.multi_reduction <add>, %31, %cst_25 [2] : vector<2x8x8xf32> to vector<2x8xf32>
    %33 = vector.shape_cast %32 : vector<2x8xf32> to vector<2x8x1xf32>
    %34 = vector.broadcast %33 : vector<2x8x1xf32> to vector<2x8x8xf32>
    %35 = arith.divf %31, %34 : vector<2x8x8xf32>
    "tpu.trace_start"() <{level = 10 : i32, message = "bqk,bkd->bqd"}> : () -> ()
    %cst_26 = arith.constant dense<0.000000e+00> : vector<2x8x16xf32>
    %36 = tpu.matmul %35, %25, %cst_26 {dimension_numbers = #tpu.dot_dimension_numbers<[2], [1], [1], [2], [0, 0, 0, 1, 1, 2], [0], [0]>} : vector<2x8x8xf32>, vector<2x8x16xf32>, vector<2x8x16xf32> -> vector<2x8x16xf32>
    "tpu.trace_stop"() : () -> ()
    %c0_27 = arith.constant 0 : index
    %c0_28 = arith.constant 0 : index
    %c0_29 = arith.constant 0 : index
    %37 = vector.load %arg10[%c0_27, %c0_28, %c0_29] : memref<2x8x16xf32, #tpu.memory_space<vmem>>, vector<2x8x16xf32>
    tpu.vector_store %arg10[%c0_27, %c0_28, %c0_29], %36 {strides = array<i32>} : memref<2x8x16xf32, #tpu.memory_space<vmem>>, vector<2x8x16xf32>,
    return
  }
  func.func @transform_0(%arg0: i32) -> (i32, i32, i32) {
    %c0_i32 = arith.constant 0 : i32
    %c0_i32_0 = arith.constant 0 : i32
    %c0_i32_1 = arith.constant 0 : i32
    return %arg0, %c0_i32, %c0_i32_0 : i32, i32, i32
  }
  func.func @transform_1(%arg0: i32) -> (i32, i32, i32) {
    %c0_i32 = arith.constant 0 : i32
    %c0_i32_0 = arith.constant 0 : i32
    %c0_i32_1 = arith.constant 0 : i32
    return %arg0, %c0_i32, %c0_i32_0 : i32, i32, i32
  }
  func.func @transform_2(%arg0: i32) -> (i32, i32, i32) {
    %c0_i32 = arith.constant 0 : i32
    %c0_i32_0 = arith.constant 0 : i32
    %c0_i32_1 = arith.constant 0 : i32
    return %arg0, %c0_i32, %c0_i32_0 : i32, i32, i32
  }
  func.func @transform_3(%arg0: i32) -> (i32, i32) {
    %c0_i32 = arith.constant 0 : i32
    %c0_i32_0 = arith.constant 0 : i32
    %c0_i32_1 = arith.constant 0 : i32
    return %c0_i32, %c0_i32_0 : i32, i32
  }
  func.func @transform_4(%arg0: i32) -> (i32, i32) {
    %c0_i32 = arith.constant 0 : i32
    %c0_i32_0 = arith.constant 0 : i32
    %c0_i32_1 = arith.constant 0 : i32
    return %c0_i32, %c0_i32_0 : i32, i32
  }
  func.func @transform_5(%arg0: i32) -> (i32, i32) {
    %c0_i32 = arith.constant 0 : i32
    %c0_i32_0 = arith.constant 0 : i32
    %c0_i32_1 = arith.constant 0 : i32
    return %c0_i32, %c0_i32_0 : i32, i32
  }
  func.func @transform_6(%arg0: i32) -> (i32, i32) {
    %c0_i32 = arith.constant 0 : i32
    %c0_i32_0 = arith.constant 0 : i32
    %c0_i32_1 = arith.constant 0 : i32
    return %c0_i32, %c0_i32_0 : i32, i32
  }
  func.func @transform_7(%arg0: i32) -> (i32, i32) {
    %c0_i32 = arith.constant 0 : i32
    %c0_i32_0 = arith.constant 0 : i32
    %c0_i32_1 = arith.constant 0 : i32
    return %c0_i32, %c0_i32_0 : i32, i32
  }
  func.func @transform_8(%arg0: i32) -> (i32, i32) {
    %c0_i32 = arith.constant 0 : i32
    %c0_i32_0 = arith.constant 0 : i32
    %c0_i32_1 = arith.constant 0 : i32
    return %c0_i32, %c0_i32_0 : i32, i32
  }
  func.func @transform_9(%arg0: i32) -> (i32, i32, i32) {
    %c0_i32 = arith.constant 0 : i32
    %c0_i32_0 = arith.constant 0 : i32
    %c0_i32_1 = arith.constant 0 : i32
    return %arg0, %c0_i32, %c0_i32_0 : i32, i32, i32
  }
}

</mosaic_0001>

<llo_original>
// kernel: tpu_custom_call.1
$region0: #{tpu_custom_call.1}
  #allocation0 [shape = 'u32[]', space=smem, size = 0x4, offset = 0x4, fixed_abs, tag = 'smem constant byte address 0x4 - core index']
  #allocation1 [shape = 'u32[144,128]{1,0:T(1,128)}', space=vmem, size = 0x12000, scoped, tag = 'internal scratch']
  %s0 = inlined_call_operand.vmem [shape: f32[2,8,32], index: 0, kind: input, shape index: {}]
  %s1 = inlined_call_operand.vmem [shape: f32[2,8,32], index: 1, kind: input, shape index: {}]
  %s2 = inlined_call_operand.vmem [shape: f32[2,8,32], index: 2, kind: input, shape index: {}]
  %s3 = inlined_call_operand.vmem [shape: f32[32,16], index: 3, kind: input, shape index: {}]
  %s4 = inlined_call_operand.vmem [shape: f32[1,16], index: 4, kind: input, shape index: {}]
  %s5 = inlined_call_operand.vmem [shape: f32[32,16], index: 5, kind: input, shape index: {}]
  %s6 = inlined_call_operand.vmem [shape: f32[1,16], index: 6, kind: input, shape index: {}]
  %s7 = inlined_call_operand.vmem [shape: f32[32,16], index: 7, kind: input, shape index: {}]
  %s8 = inlined_call_operand.vmem [shape: f32[1,16], index: 8, kind: input, shape index: {}]
  %s9 = inlined_call_operand.hbm [shape: f32[2,8,16], index: 9, kind: output, shape index: {}]
  %s10 = sld [smem:[#allocation0]]
  $region46: #{tpu_custom_call.1} parent=0
    _
  %s12 = ssub.s32 1, %s10
  %s13 = scalar_select 0, %s12, %s10
  $region1: #{tpu_custom_call.1} parent=0
    #allocation2 [shape = 'u8[8192]{0}', space=vmem, size = 0x2000, scoped, tag = 'output window, operand 0, single buffered']
    #allocation3 [shape = 's32[1]{0}', space=sflag, size = 0x4, scoped, tag = 'scoped memory for tpu_custom_call.1']
    %14 = vsyncpa [#allocation3], 0
    // Predicated region
    $region2: #{tpu_custom_call.1} parent=1 // pred_check
      _
    $region3: #{tpu_custom_call.1} parent=1 // pred_check_branch
      %16 = sbr.rel (0) target = $region5
    $region4: #{tpu_custom_call.1} parent=1 // pred_region
      _
    $region5: #{tpu_custom_call.1} parent=1 // pred_fallthru
      _
    // Predicated region
    $region6: #{tpu_custom_call.1} parent=1 // pred_check
      _
    $region7: #{tpu_custom_call.1} parent=1 // pred_check_branch
      %18 = sbr.rel (0) target = $region9
    $region8: #{tpu_custom_call.1} parent=1 // pred_region
      _
    $region9: #{tpu_custom_call.1} parent=1 // pred_fallthru
      _
    // Predicated region
    $region10: #{tpu_custom_call.1} parent=1 // pred_check
      _
    $region11: #{tpu_custom_call.1} parent=1 // pred_check_branch
      %20 = sbr.rel (0) target = $region13
    $region12: #{tpu_custom_call.1} parent=1 // pred_region
      _
    $region13: #{tpu_custom_call.1} parent=1 // pred_fallthru
      _
    // Predicated region
    $region14: #{tpu_custom_call.1} parent=1 // pred_check
      _
    $region15: #{tpu_custom_call.1} parent=1 // pred_check_branch
      %22 = sbr.rel (0) target = $region17
    $region16: #{tpu_custom_call.1} parent=1 // pred_region
      _
    $region17: #{tpu_custom_call.1} parent=1 // pred_fallthru
      _
    // Predicated region
    $region18: #{tpu_custom_call.1} parent=1 // pred_check
      _
    $region19: #{tpu_custom_call.1} parent=1 // pred_check_branch
      %24 = sbr.rel (0) target = $region21
    $region20: #{tpu_custom_call.1} parent=1 // pred_region
      _
    $region21: #{tpu_custom_call.1} parent=1 // pred_fallthru
      _
    // Predicated region
    $region22: #{tpu_custom_call.1} parent=1 // pred_check
      _
    $region23: #{tpu_custom_call.1} parent=1 // pred_check_branch
      %26 = sbr.rel (0) target = $region25
    $region24: #{tpu_custom_call.1} parent=1 // pred_region
      _
    $region25: #{tpu_custom_call.1} parent=1 // pred_fallthru
      _
    // Predicated region
    $region26: #{tpu_custom_call.1} parent=1 // pred_check
      _
    $region27: #{tpu_custom_call.1} parent=1 // pred_check_branch
      %28 = sbr.rel (0) target = $region29
    $region28: #{tpu_custom_call.1} parent=1 // pred_region
      _
    $region29: #{tpu_custom_call.1} parent=1 // pred_fallthru
      _
    // Predicated region
    $region30: #{tpu_custom_call.1} parent=1 // pred_check
      _
    $region31: #{tpu_custom_call.1} parent=1 // pred_check_branch
      %30 = sbr.rel (0) target = $region33
    $region32: #{tpu_custom_call.1} parent=1 // pred_region
      _
    $region33: #{tpu_custom_call.1} parent=1 // pred_fallthru
      _
    // Predicated region
    $region34: #{tpu_custom_call.1} parent=1 // pred_check
      _
    $region35: #{tpu_custom_call.1} parent=1 // pred_check_branch
      %32 = sbr.rel (0) target = $region37
    $region36: #{tpu_custom_call.1} parent=1 // pred_region
      _
    $region37: #{tpu_custom_call.1} parent=1 // pred_fallthru
      _
    %v33 = vld [vmem:[%s0] sm:$0xff]
    %v34 = vld [vmem:[%s0 + $0x8] sm:$0xff]
    %v35 = vld [vmem:[%s3] sm:$0xff]
    %v36 = vld [vmem:[%s3 + $0x8] sm:$0xff]
    %v37 = vld [vmem:[%s3 + $0x10] sm:$0xff]
    %v38 = vld [vmem:[%s3 + $0x18] sm:$0xff]
    %v39 = vld [vmem:[%s4] sm:$0x1]
    %v41 = vlaneseq
    %v42 = vshrl.u32 %v41, 7
    %v43 = vsub.s32 0, %v42
    %v44 = vrot.slane %v39, %v43
    %vm46 = vcmask 261120
    %v48 = vsel %vm46, %v33, 0
    %v51 = vsel %vm46, %v34, 0
    %53 = vmatprep.subr.mxu0 0.0
    %54 = vmatpush1.msra.mxu0 %v35
    %55 = vmatprep.subr.mxu0 0.0
    %56 = vmatpush1.msra.mxu0 %v36
    %57 = vmatprep.subr.mxu0 0.0
    %58 = vmatpush1.msra.mxu0 %v37
    %59 = vmatprep.subr.mxu0 0.0
    %60 = vmatpush1.msra.mxu0 %v38
    %61 = vmatprep.subr.mxu0 0.0
    %62 = vmatpush1.msra.mxu0 0.0
    %63 = vmatprep.subr.mxu0 0.0
    %64 = vmatpush1.msra.mxu0 0.0
    %65 = vmatprep.subr.mxu0 0.0
    %66 = vmatpush1.msra.mxu0 0.0
    %67 = vmatprep.subr.mxu0 0.0
    %68 = vmatpush1.msra.mxu0 0.0
    %69 = vmatprep.subr.mxu0 0.0
    %70 = vmatpush1.msra.mxu0 0.0
    %71 = vmatprep.subr.mxu0 0.0
    %72 = vmatpush1.msra.mxu0 0.0
    %73 = vmatprep.subr.mxu0 0.0
    %74 = vmatpush1.msra.mxu0 0.0
    %75 = vmatprep.subr.mxu0 0.0
    %76 = vmatpush1.msra.mxu0 0.0
    %77 = vmatprep.subr.mxu0 0.0
    %78 = vmatpush1.msra.mxu0 0.0
    %79 = vmatprep.subr.mxu0 0.0
    %80 = vmatpush1.msra.mxu0 0.0
    %81 = vmatprep.subr.mxu0 0.0
    %82 = vmatpush1.msra.mxu0 0.0
    %83 = vmatprep.subr.mxu0 0.0
    %84 = vmatpush1.msra.mxu0 0.0
    %85 = vmatprep.subr.mxu0 0.0
    %86 = vmatpush1.msra.mxu0 0.0
    %87 = vmatprep.subr.mxu0 0.0
    %88 = vmatpush1.msra.mxu0 0.0
    %89 = vmatprep.subr.mxu0 0.0
    %90 = vmatpush1.msra.mxu0 0.0
    %91 = vmatprep.subr.mxu0 0.0
    %92 = vmatpush1.msra.mxu0 0.0
    %93 = vmatprep.subr.mxu0 0.0
    %94 = vmatpush1.msra.mxu0 0.0
    %95 = vmatprep.subr.mxu0 0.0
    %96 = vmatpush1.msra.mxu0 0.0
    %97 = vmatprep.subr.mxu0 0.0
    %98 = vmatpush1.msra.mxu0 0.0
    %99 = vmatprep.subr.mxu0 0.0
    %100 = vmatpush1.msra.mxu0 0.0
    %101 = vmatprep.subr.mxu0 0.0
    %102 = vmatpush1.msra.mxu0 0.0
    %103 = vmatprep.subr.mxu0 0.0
    %104 = vmatpush1.msra.mxu0 0.0
    %105 = vmatprep.subr.mxu0 0.0
    %106 = vmatpush1.msra.mxu0 0.0
    %107 = vmatprep.subr.mxu0 0.0
    %108 = vmatpush1.msra.mxu0 0.0
    %109 = vmatprep.subr.mxu0 0.0
    %110 = vmatpush1.msra.mxu0 0.0
    %111 = vmatprep.subr.mxu0 0.0
    %112 = vmatpush1.msra.mxu0 0.0
    %113 = vmatprep.subr.mxu0 0.0
    %114 = vmatpush1.msra.mxu0 0.0
    %115 = vmatprep.subr.mxu0 0.0
    %116 = vmatpush1.msra.mxu0 0.0
    %117 = vmatprep.mubr.f32.mxu0 0.0
    %118 = vmatmul.mubr.f32.gmra.mrb[0].mxu0 %v48
    %v119 = vpop.f32.mrb[0].mxu0
    %v120 = vadd.f32 %v44, %v119
    %v121 = vpop.f32.mrb[0].mxu0
    %122 = vmatprep.mubr.f32.mxu0 0.0
    %123 = vmatmul.mubr.f32.gmra.mrb[0].mxu0 %v51
    %v124 = vpop.f32.mrb[0].mxu0
    %v125 = vadd.f32 %v44, %v124
    %v126 = vpop.f32.mrb[0].mxu0
    %127 = vdwg.mxu0
    %v128 = vmul.f32 %v120, 0.25
    %v129 = vmul.f32 %v125, 0.25
    %v130 = vld [vmem:[%s1] sm:$0xff]
    %v131 = vld [vmem:[%s1 + $0x8] sm:$0xff]
    %v132 = vld [vmem:[%s5] sm:$0xff]
    %v133 = vld [vmem:[%s5 + $0x8] sm:$0xff]
    %v134 = vld [vmem:[%s5 + $0x10] sm:$0xff]
    %v135 = vld [vmem:[%s5 + $0x18] sm:$0xff]
    %v136 = vld [vmem:[%s6] sm:$0x1]
    %v138 = vlaneseq
    %v139 = vshrl.u32 %v138, 7
    %v140 = vsub.s32 0, %v139
    %v141 = vrot.slane %v136, %v140
    %v144 = vsel %vm46, %v130, 0
    %v147 = vsel %vm46, %v131, 0
    %149 = vmatprep.subr.mxu0 0.0
    %150 = vmatpush1.msra.mxu0 %v132
    %151 = vmatprep.subr.mxu0 0.0
    %152 = vmatpush1.msra.mxu0 %v133
    %153 = vmatprep.subr.mxu0 0.0
    %154 = vmatpush1.msra.mxu0 %v134
    %155 = vmatprep.subr.mxu0 0.0
    %156 = vmatpush1.msra.mxu0 %v135
    %157 = vmatprep.subr.mxu0 0.0
    %158 = vmatpush1.msra.mxu0 0.0
    %159 = vmatprep.subr.mxu0 0.0
    %160 = vmatpush1.msra.mxu0 0.0
    %161 = vmatprep.subr.mxu0 0.0
    %162 = vmatpush1.msra.mxu0 0.0
    %163 = vmatprep.subr.mxu0 0.0
    %164 = vmatpush1.msra.mxu0 0.0
    %165 = vmatprep.subr.mxu0 0.0
    %166 = vmatpush1.msra.mxu0 0.0
    %167 = vmatprep.subr.mxu0 0.0
    %168 = vmatpush1.msra.mxu0 0.0
    %169 = vmatprep.subr.mxu0 0.0
    %170 = vmatpush1.msra.mxu0 0.0
    %171 = vmatprep.subr.mxu0 0.0
    %172 = vmatpush1.msra.mxu0 0.0
    %173 = vmatprep.subr.mxu0 0.0
    %174 = vmatpush1.msra.mxu0 0.0
    %175 = vmatprep.subr.mxu0 0.0
    %176 = vmatpush1.msra.mxu0 0.0
    %177 = vmatprep.subr.mxu0 0.0
    %178 = vmatpush1.msra.mxu0 0.0
    %179 = vmatprep.subr.mxu0 0.0
    %180 = vmatpush1.msra.mxu0 0.0
    %181 = vmatprep.subr.mxu0 0.0
    %182 = vmatpush1.msra.mxu0 0.0
    %183 = vmatprep.subr.mxu0 0.0
    %184 = vmatpush1.msra.mxu0 0.0
    %185 = vmatprep.subr.mxu0 0.0
    %186 = vmatpush1.msra.mxu0 0.0
    %187 = vmatprep.subr.mxu0 0.0
    %188 = vmatpush1.msra.mxu0 0.0
    %189 = vmatprep.subr.mxu0 0.0
    %190 = vmatpush1.msra.mxu0 0.0
    %191 = vmatprep.subr.mxu0 0.0
    %192 = vmatpush1.msra.mxu0 0.0
    %193 = vmatprep.subr.mxu0 0.0
    %194 = vmatpush1.msra.mxu0 0.0
    %195 = vmatprep.subr.mxu0 0.0
    %196 = vmatpush1.msra.mxu0 0.0
    %197 = vmatprep.subr.mxu0 0.0
    %198 = vmatpush1.msra.mxu0 0.0
    %199 = vmatprep.subr.mxu0 0.0
    %200 = vmatpush1.msra.mxu0 0.0
    %201 = vmatprep.subr.mxu0 0.0
    %202 = vmatpush1.msra.mxu0 0.0
    %203 = vmatprep.subr.mxu0 0.0
    %204 = vmatpush1.msra.mxu0 0.0
    %205 = vmatprep.subr.mxu0 0.0
    %206 = vmatpush1.msra.mxu0 0.0
    %207 = vmatprep.subr.mxu0 0.0
    %208 = vmatpush1.msra.mxu0 0.0
    %209 = vmatprep.subr.mxu0 0.0
    %210 = vmatpush1.msra.mxu0 0.0
    %211 = vmatprep.subr.mxu0 0.0
    %212 = vmatpush1.msra.mxu0 0.0
    %213 = vmatprep.mubr.f32.mxu0 0.0
    %214 = vmatmul.mubr.f32.gmra.mrb[0].mxu0 %v144
    %v215 = vpop.f32.mrb[0].mxu0
    %v216 = vadd.f32 %v141, %v215
    %v217 = vpop.f32.mrb[0].mxu0
    %218 = vmatprep.mubr.f32.mxu0 0.0
    %219 = vmatmul.mubr.f32.gmra.mrb[0].mxu0 %v147
    %v220 = vpop.f32.mrb[0].mxu0
    %v221 = vadd.f32 %v141, %v220
    %v222 = vpop.f32.mrb[0].mxu0
    %223 = vdwg.mxu0
    %v224 = vld [vmem:[%s2] sm:$0xff]
    %v225 = vld [vmem:[%s2 + $0x8] sm:$0xff]
    %v226 = vld [vmem:[%s7] sm:$0xff]
    %v227 = vld [vmem:[%s7 + $0x8] sm:$0xff]
    %v228 = vld [vmem:[%s7 + $0x10] sm:$0xff]
    %v229 = vld [vmem:[%s7 + $0x18] sm:$0xff]
    %v230 = vld [vmem:[%s8] sm:$0x1]
    %v232 = vlaneseq
    %v233 = vshrl.u32 %v232, 7
    %v234 = vsub.s32 0, %v233
    %v235 = vrot.slane %v230, %v234
    %v238 = vsel %vm46, %v224, 0
    %v241 = vsel %vm46, %v225, 0
    %243 = vmatprep.subr.mxu0 0.0
    %244 = vmatpush1.msra.mxu0 %v226
    %245 = vmatprep.subr.mxu0 0.0
    %246 = vmatpush1.msra.mxu0 %v227
    %247 = vmatprep.subr.mxu0 0.0
    %248 = vmatpush1.msra.mxu0 %v228
    %249 = vmatprep.subr.mxu0 0.0
    %250 = vmatpush1.msra.mxu0 %v229
    %251 = vmatprep.subr.mxu0 0.0
    %252 = vmatpush1.msra.mxu0 0.0
    %253 = vmatprep.subr.mxu0 0.0
    %254 = vmatpush1.msra.mxu0 0.0
    %255 = vmatprep.subr.mxu0 0.0
    %256 = vmatpush1.msra.mxu0 0.0
    %257 = vmatprep.subr.mxu0 0.0
    %258 = vmatpush1.msra.mxu0 0.0
    %259 = vmatprep.subr.mxu0 0.0
    %260 = vmatpush1.msra.mxu0 0.0
    %261 = vmatprep.subr.mxu0 0.0
    %262 = vmatpush1.msra.mxu0 0.0
    %263 = vmatprep.subr.mxu0 0.0
    %264 = vmatpush1.msra.mxu0 0.0
    %265 = vmatprep.subr.mxu0 0.0
    %266 = vmatpush1.msra.mxu0 0.0
    %267 = vmatprep.subr.mxu0 0.0
    %268 = vmatpush1.msra.mxu0 0.0
    %269 = vmatprep.subr.mxu0 0.0
    %270 = vmatpush1.msra.mxu0 0.0
    %271 = vmatprep.subr.mxu0 0.0
    %272 = vmatpush1.msra.mxu0 0.0
    %273 = vmatprep.subr.mxu0 0.0
    %274 = vmatpush1.msra.mxu0 0.0
    %275 = vmatprep.subr.mxu0 0.0
    %276 = vmatpush1.msra.mxu0 0.0
    %277 = vmatprep.subr.mxu0 0.0
    %278 = vmatpush1.msra.mxu0 0.0
    %279 = vmatprep.subr.mxu0 0.0
    %280 = vmatpush1.msra.mxu0 0.0
    %281 = vmatprep.subr.mxu0 0.0
    %282 = vmatpush1.msra.mxu0 0.0
    %283 = vmatprep.subr.mxu0 0.0
    %284 = vmatpush1.msra.mxu0 0.0
    %285 = vmatprep.subr.mxu0 0.0
    %286 = vmatpush1.msra.mxu0 0.0
    %287 = vmatprep.subr.mxu0 0.0
    %288 = vmatpush1.msra.mxu0 0.0
    %289 = vmatprep.subr.mxu0 0.0
    %290 = vmatpush1.msra.mxu0 0.0
    %291 = vmatprep.subr.mxu0 0.0
    %292 = vmatpush1.msra.mxu0 0.0
    %293 = vmatprep.subr.mxu0 0.0
    %294 = vmatpush1.msra.mxu0 0.0
    %295 = vmatprep.subr.mxu0 0.0
    %296 = vmatpush1.msra.mxu0 0.0
    %297 = vmatprep.subr.mxu0 0.0
    %298 = vmatpush1.msra.mxu0 0.0
    %299 = vmatprep.subr.mxu0 0.0
    %300 = vmatpush1.msra.mxu0 0.0
    %301 = vmatprep.subr.mxu0 0.0
    %302 = vmatpush1.msra.mxu0 0.0
    %303 = vmatprep.subr.mxu0 0.0
    %304 = vmatpush1.msra.mxu0 0.0
    %305 = vmatprep.subr.mxu0 0.0
    %306 = vmatpush1.msra.mxu0 0.0
    %307 = vmatprep.mubr.f32.mxu0 0.0
    %308 = vmatmul.mubr.f32.gmra.mrb[0].mxu0 %v238
    %v309 = vpop.f32.mrb[0].mxu0
    %v310 = vadd.f32 %v235, %v309
    %v311 = vpop.f32.mrb[0].mxu0
    %312 = vmatprep.mubr.f32.mxu0 0.0
    %313 = vmatmul.mubr.f32.gmra.mrb[0].mxu0 %v241
    %v314 = vpop.f32.mrb[0].mxu0
    %v315 = vadd.f32 %v235, %v314
    %v316 = vpop.f32.mrb[0].mxu0
    %317 = vdwg.mxu0
    %vm318 = vcmask 130048
    %v320 = vsel %vm318, %v128, 0
    %v323 = vsel %vm318, %v216, 0
    %325 = vmatprep.subr.mxu0 0.0
    %326 = vmatpush1.xpose.msra.mxu0 %v323
    %327 = vmatprep.subr.mxu0 0.0
    %328 = vmatpush1.xpose.msra.mxu0 0.0
    %329 = vmatprep.subr.mxu0 0.0
    %330 = vmatpush1.xpose.msra.mxu0 0.0
    %331 = vmatprep.subr.mxu0 0.0
    %332 = vmatpush1.xpose.msra.mxu0 0.0
    %333 = vmatprep.subr.mxu0 0.0
    %334 = vmatpush1.xpose.msra.mxu0 0.0
    %335 = vmatprep.subr.mxu0 0.0
    %336 = vmatpush1.xpose.msra.mxu0 0.0
    %337 = vmatprep.subr.mxu0 0.0
    %338 = vmatpush1.xpose.msra.mxu0 0.0
    %339 = vmatprep.subr.mxu0 0.0
    %340 = vmatpush1.xpose.msra.mxu0 0.0
    %341 = vmatprep.subr.mxu0 0.0
    %342 = vmatpush1.xpose.msra.mxu0 0.0
    %343 = vmatprep.subr.mxu0 0.0
    %344 = vmatpush1.xpose.msra.mxu0 0.0
    %345 = vmatprep.subr.mxu0 0.0
    %346 = vmatpush1.xpose.msra.mxu0 0.0
    %347 = vmatprep.subr.mxu0 0.0
    %348 = vmatpush1.xpose.msra.mxu0 0.0
    %349 = vmatprep.subr.mxu0 0.0
    %350 = vmatpush1.xpose.msra.mxu0 0.0
    %351 = vmatprep.subr.mxu0 0.0
    %352 = vmatpush1.xpose.msra.mxu0 0.0
    %353 = vmatprep.subr.mxu0 0.0
    %354 = vmatpush1.xpose.msra.mxu0 0.0
    %355 = vmatprep.subr.mxu0 0.0
    %356 = vmatpush1.xpose.msra.mxu0 0.0
    %357 = vmatprep.subr.mxu0 0.0
    %358 = vmatpush1.xpose.msra.mxu0 0.0
    %359 = vmatprep.subr.mxu0 0.0
    %360 = vmatpush1.xpose.msra.mxu0 0.0
    %361 = vmatprep.subr.mxu0 0.0
    %362 = vmatpush1.xpose.msra.mxu0 0.0
    %363 = vmatprep.subr.mxu0 0.0
    %364 = vmatpush1.xpose.msra.mxu0 0.0
    %365 = vmatprep.subr.mxu0 0.0
    %366 = vmatpush1.xpose.msra.mxu0 0.0
    %367 = vmatprep.subr.mxu0 0.0
    %368 = vmatpush1.xpose.msra.mxu0 0.0
    %369 = vmatprep.subr.mxu0 0.0
    %370 = vmatpush1.xpose.msra.mxu0 0.0
    %371 = vmatprep.subr.mxu0 0.0
    %372 = vmatpush1.xpose.msra.mxu0 0.0
    %373 = vmatprep.subr.mxu0 0.0
    %374 = vmatpush1.xpose.msra.mxu0 0.0
    %375 = vmatprep.subr.mxu0 0.0
    %376 = vmatpush1.xpose.msra.mxu0 0.0
    %377 = vmatprep.subr.mxu0 0.0
    %378 = vmatpush1.xpose.msra.mxu0 0.0
    %379 = vmatprep.subr.mxu0 0.0
    %380 = vmatpush1.xpose.msra.mxu0 0.0
    %381 = vmatprep.subr.mxu0 0.0
    %382 = vmatpush1.xpose.msra.mxu0 0.0
    %383 = vmatprep.subr.mxu0 0.0
    %384 = vmatpush1.xpose.msra.mxu0 0.0
    %385 = vmatprep.subr.mxu0 0.0
    %386 = vmatpush1.xpose.msra.mxu0 0.0
    %387 = vmatprep.subr.mxu0 0.0
    %388 = vmatpush1.xpose.msra.mxu0 0.0
    %389 = vmatprep.mubr.f32.mxu0 0.0
    %390 = vmatmul.mubr.f32.gmra.mrb[0].mxu0 %v320
    %v391 = vpop.f32.mrb[0].mxu0
    %v392 = vadd.f32 0.0, %v391
    %v393 = vpop.f32.mrb[0].mxu0
    %394 = vdwg.mxu0
    %v396 = vsel %vm318, %v129, 0
    %v399 = vsel %vm318, %v221, 0
    %401 = vmatprep.subr.mxu0 0.0
    %402 = vmatpush1.xpose.msra.mxu0 %v399
    %403 = vmatprep.subr.mxu0 0.0
    %404 = vmatpush1.xpose.msra.mxu0 0.0
    %405 = vmatprep.subr.mxu0 0.0
    %406 = vmatpush1.xpose.msra.mxu0 0.0
    %407 = vmatprep.subr.mxu0 0.0
    %408 = vmatpush1.xpose.msra.mxu0 0.0
    %409 = vmatprep.subr.mxu0 0.0
    %410 = vmatpush1.xpose.msra.mxu0 0.0
    %411 = vmatprep.subr.mxu0 0.0
    %412 = vmatpush1.xpose.msra.mxu0 0.0
    %413 = vmatprep.subr.mxu0 0.0
    %414 = vmatpush1.xpose.msra.mxu0 0.0
    %415 = vmatprep.subr.mxu0 0.0
    %416 = vmatpush1.xpose.msra.mxu0 0.0
    %417 = vmatprep.subr.mxu0 0.0
    %418 = vmatpush1.xpose.msra.mxu0 0.0
    %419 = vmatprep.subr.mxu0 0.0
    %420 = vmatpush1.xpose.msra.mxu0 0.0
    %421 = vmatprep.subr.mxu0 0.0
    %422 = vmatpush1.xpose.msra.mxu0 0.0
    %423 = vmatprep.subr.mxu0 0.0
    %424 = vmatpush1.xpose.msra.mxu0 0.0
    %425 = vmatprep.subr.mxu0 0.0
    %426 = vmatpush1.xpose.msra.mxu0 0.0
    %427 = vmatprep.subr.mxu0 0.0
    %428 = vmatpush1.xpose.msra.mxu0 0.0
    %429 = vmatprep.subr.mxu0 0.0
    %430 = vmatpush1.xpose.msra.mxu0 0.0
    %431 = vmatprep.subr.mxu0 0.0
    %432 = vmatpush1.xpose.msra.mxu0 0.0
    %433 = vmatprep.subr.mxu0 0.0
    %434 = vmatpush1.xpose.msra.mxu0 0.0
    %435 = vmatprep.subr.mxu0 0.0
    %436 = vmatpush1.xpose.msra.mxu0 0.0
    %437 = vmatprep.subr.mxu0 0.0
    %438 = vmatpush1.xpose.msra.mxu0 0.0
    %439 = vmatprep.subr.mxu0 0.0
    %440 = vmatpush1.xpose.msra.mxu0 0.0
    %441 = vmatprep.subr.mxu0 0.0
    %442 = vmatpush1.xpose.msra.mxu0 0.0
    %443 = vmatprep.subr.mxu0 0.0
    %444 = vmatpush1.xpose.msra.mxu0 0.0
    %445 = vmatprep.subr.mxu0 0.0
    %446 = vmatpush1.xpose.msra.mxu0 0.0
    %447 = vmatprep.subr.mxu0 0.0
    %448 = vmatpush1.xpose.msra.mxu0 0.0
    %449 = vmatprep.subr.mxu0 0.0
    %450 = vmatpush1.xpose.msra.mxu0 0.0
    %451 = vmatprep.subr.mxu0 0.0
    %452 = vmatpush1.xpose.msra.mxu0 0.0
    %453 = vmatprep.subr.mxu0 0.0
    %454 = vmatpush1.xpose.msra.mxu0 0.0
    %455 = vmatprep.subr.mxu0 0.0
    %456 = vmatpush1.xpose.msra.mxu0 0.0
    %457 = vmatprep.subr.mxu0 0.0
    %458 = vmatpush1.xpose.msra.mxu0 0.0
    %459 = vmatprep.subr.mxu0 0.0
    %460 = vmatpush1.xpose.msra.mxu0 0.0
    %461 = vmatprep.subr.mxu0 0.0
    %462 = vmatpush1.xpose.msra.mxu0 0.0
    %463 = vmatprep.subr.mxu0 0.0
    %464 = vmatpush1.xpose.msra.mxu0 0.0
    %465 = vmatprep.mubr.f32.mxu0 0.0
    %466 = vmatmul.mubr.f32.gmra.mrb[0].mxu0 %v396
    %v467 = vpop.f32.mrb[0].mxu0
    %v468 = vadd.f32 0.0, %v467
    %v469 = vpop.f32.mrb[0].mxu0
    %470 = vdwg.mxu0
    %vm471 = vcmask 64512
    %v472 = vsel %vm471, %v392, -inf
    %473 = vmax.xlane.f32.xlu0 %v472
    %v474 = vpop.xlane.xlu0 %473
    %v475 = vsel %vm471, %v468, -inf
    %476 = vmax.xlane.f32.xlu0 %v475
    %v477 = vpop.xlane.xlu0 %476
    %v478 = vsub.f32 %v392, %v474
    %v479 = vsub.f32 %v468, %v477
    %v480 = vmul.f32 %v478, 1.442695
    %v481 = vpow.pop %v480
    %v482 = vmul.f32 %v479, 1.442695
    %v483 = vpow.pop %v482
    %v484 = vsel %vm471, %v481, 0.0
    %485 = vadd.xlane.f32.xlu0 %v484
    %v486 = vpop.xlane.xlu0 %485
    %v487 = vsel %vm471, %v483, 0.0
    %488 = vadd.xlane.f32.xlu0 %v487
    %v489 = vpop.xlane.xlu0 %488
    %v490 = vrcp.pop %v486
    %v491 = vmul.f32 %v481, %v490
    %v492 = vrcp.pop %v489
    %v493 = vmul.f32 %v483, %v492
    %v495 = vsel %vm471, %v491, 0
    %497 = vmatprep.subr.mxu0 0.0
    %498 = vmatpush1.msra.mxu0 %v310
    %499 = vmatprep.subr.mxu0 0.0
    %500 = vmatpush1.msra.mxu0 0.0
    %501 = vmatprep.subr.mxu0 0.0
    %502 = vmatpush1.msra.mxu0 0.0
    %503 = vmatprep.subr.mxu0 0.0
    %504 = vmatpush1.msra.mxu0 0.0
    %505 = vmatprep.subr.mxu0 0.0
    %506 = vmatpush1.msra.mxu0 0.0
    %507 = vmatprep.subr.mxu0 0.0
    %508 = vmatpush1.msra.mxu0 0.0
    %509 = vmatprep.subr.mxu0 0.0
    %510 = vmatpush1.msra.mxu0 0.0
    %511 = vmatprep.subr.mxu0 0.0
    %512 = vmatpush1.msra.mxu0 0.0
    %513 = vmatprep.subr.mxu0 0.0
    %514 = vmatpush1.msra.mxu0 0.0
    %515 = vmatprep.subr.mxu0 0.0
    %516 = vmatpush1.msra.mxu0 0.0
    %517 = vmatprep.subr.mxu0 0.0
    %518 = vmatpush1.msra.mxu0 0.0
    %519 = vmatprep.subr.mxu0 0.0
    %520 = vmatpush1.msra.mxu0 0.0
    %521 = vmatprep.subr.mxu0 0.0
    %522 = vmatpush1.msra.mxu0 0.0
    %523 = vmatprep.subr.mxu0 0.0
    %524 = vmatpush1.msra.mxu0 0.0
    %525 = vmatprep.subr.mxu0 0.0
    %526 = vmatpush1.msra.mxu0 0.0
    %527 = vmatprep.subr.mxu0 0.0
    %528 = vmatpush1.msra.mxu0 0.0
    %529 = vmatprep.subr.mxu0 0.0
    %530 = vmatpush1.msra.mxu0 0.0
    %531 = vmatprep.subr.mxu0 0.0
    %532 = vmatpush1.msra.mxu0 0.0
    %533 = vmatprep.subr.mxu0 0.0
    %534 = vmatpush1.msra.mxu0 0.0
    %535 = vmatprep.subr.mxu0 0.0
    %536 = vmatpush1.msra.mxu0 0.0
    %537 = vmatprep.subr.mxu0 0.0
    %538 = vmatpush1.msra.mxu0 0.0
    %539 = vmatprep.subr.mxu0 0.0
    %540 = vmatpush1.msra.mxu0 0.0
    %541 = vmatprep.subr.mxu0 0.0
    %542 = vmatpush1.msra.mxu0 0.0
    %543 = vmatprep.subr.mxu0 0.0
    %544 = vmatpush1.msra.mxu0 0.0
    %545 = vmatprep.subr.mxu0 0.0
    %546 = vmatpush1.msra.mxu0 0.0
    %547 = vmatprep.subr.mxu0 0.0
    %548 = vmatpush1.msra.mxu0 0.0
    %549 = vmatprep.subr.mxu0 0.0
    %550 = vmatpush1.msra.mxu0 0.0
    %551 = vmatprep.subr.mxu0 0.0
    %552 = vmatpush1.msra.mxu0 0.0
    %553 = vmatprep.subr.mxu0 0.0
    %554 = vmatpush1.msra.mxu0 0.0
    %555 = vmatprep.subr.mxu0 0.0
    %556 = vmatpush1.msra.mxu0 0.0
    %557 = vmatprep.subr.mxu0 0.0
    %558 = vmatpush1.msra.mxu0 0.0
    %559 = vmatprep.subr.mxu0 0.0
    %560 = vmatpush1.msra.mxu0 0.0
    %561 = vmatprep.mubr.f32.mxu0 0.0
    %562 = vmatmul.mubr.f32.gmra.mrb[0].mxu0 %v495
    %v563 = vpop.f32.mrb[0].mxu0
    %v564 = vadd.f32 0.0, %v563
    %v565 = vpop.f32.mrb[0].mxu0
    %566 = vdwg.mxu0
    %v568 = vsel %vm471, %v493, 0
    %570 = vmatprep.subr.mxu0 0.0
    %571 = vmatpush1.msra.mxu0 %v315
    %572 = vmatprep.subr.mxu0 0.0
    %573 = vmatpush1.msra.mxu0 0.0
    %574 = vmatprep.subr.mxu0 0.0
    %575 = vmatpush1.msra.mxu0 0.0
    %576 = vmatprep.subr.mxu0 0.0
    %577 = vmatpush1.msra.mxu0 0.0
    %578 = vmatprep.subr.mxu0 0.0
    %579 = vmatpush1.msra.mxu0 0.0
    %580 = vmatprep.subr.mxu0 0.0
    %581 = vmatpush1.msra.mxu0 0.0
    %582 = vmatprep.subr.mxu0 0.0
    %583 = vmatpush1.msra.mxu0 0.0
    %584 = vmatprep.subr.mxu0 0.0
    %585 = vmatpush1.msra.mxu0 0.0
    %586 = vmatprep.subr.mxu0 0.0
    %587 = vmatpush1.msra.mxu0 0.0
    %588 = vmatprep.subr.mxu0 0.0
    %589 = vmatpush1.msra.mxu0 0.0
    %590 = vmatprep.subr.mxu0 0.0
    %591 = vmatpush1.msra.mxu0 0.0
    %592 = vmatprep.subr.mxu0 0.0
    %593 = vmatpush1.msra.mxu0 0.0
    %594 = vmatprep.subr.mxu0 0.0
    %595 = vmatpush1.msra.mxu0 0.0
    %596 = vmatprep.subr.mxu0 0.0
    %597 = vmatpush1.msra.mxu0 0.0
    %598 = vmatprep.subr.mxu0 0.0
    %599 = vmatpush1.msra.mxu0 0.0
    %600 = vmatprep.subr.mxu0 0.0
    %601 = vmatpush1.msra.mxu0 0.0
    %602 = vmatprep.subr.mxu0 0.0
    %603 = vmatpush1.msra.mxu0 0.0
    %604 = vmatprep.subr.mxu0 0.0
    %605 = vmatpush1.msra.mxu0 0.0
    %606 = vmatprep.subr.mxu0 0.0
    %607 = vmatpush1.msra.mxu0 0.0
    %608 = vmatprep.subr.mxu0 0.0
    %609 = vmatpush1.msra.mxu0 0.0
    %610 = vmatprep.subr.mxu0 0.0
    %611 = vmatpush1.msra.mxu0 0.0
    %612 = vmatprep.subr.mxu0 0.0
    %613 = vmatpush1.msra.mxu0 0.0
    %614 = vmatprep.subr.mxu0 0.0
    %615 = vmatpush1.msra.mxu0 0.0
    %616 = vmatprep.subr.mxu0 0.0
    %617 = vmatpush1.msra.mxu0 0.0
    %618 = vmatprep.subr.mxu0 0.0
    %619 = vmatpush1.msra.mxu0 0.0
    %620 = vmatprep.subr.mxu0 0.0
    %621 = vmatpush1.msra.mxu0 0.0
    %622 = vmatprep.subr.mxu0 0.0
    %623 = vmatpush1.msra.mxu0 0.0
    %624 = vmatprep.subr.mxu0 0.0
    %625 = vmatpush1.msra.mxu0 0.0
    %626 = vmatprep.subr.mxu0 0.0
    %627 = vmatpush1.msra.mxu0 0.0
    %628 = vmatprep.subr.mxu0 0.0
    %629 = vmatpush1.msra.mxu0 0.0
    %630 = vmatprep.subr.mxu0 0.0
    %631 = vmatpush1.msra.mxu0 0.0
    %632 = vmatprep.subr.mxu0 0.0
    %633 = vmatpush1.msra.mxu0 0.0
    %634 = vmatprep.mubr.f32.mxu0 0.0
    %635 = vmatmul.mubr.f32.gmra.mrb[0].mxu0 %v568
    %v636 = vpop.f32.mrb[0].mxu0
    %v637 = vadd.f32 0.0, %v636
    %v638 = vpop.f32.mrb[0].mxu0
    %639 = vdwg.mxu0
    %640 = vst.msk [vmem:[#allocation2] sm:$0xff] %vm318, %v564
    %641 = vst.msk [vmem:[#allocation2 + $0x8] sm:$0xff] %vm318, %v637
    // Predicated region
    $region38: #{tpu_custom_call.1} parent=1 // pred_check
      _
    $region39: #{tpu_custom_call.1} parent=1 // pred_check_branch
      %643 = sbr.rel (0) target = $region41
    $region40: #{tpu_custom_call.1} parent=1 // pred_region
      %s645 = ssub.s32 256, 256
      %646 = vsyncadd [#allocation3], %s645
      %s647 = sshll.u32 [#allocation2], 4
      %s648 = int_to_ptr.vmem [resolvable:$true] %s647
      %653 = dma.vmem_to_hbm [thread:$0]  %s648, 256, %s9, [#allocation3], 128, 128, 8
    $region41: #{tpu_custom_call.1} parent=1 // pred_fallthru
      _
    // Predicated region
    $region42: #{tpu_custom_call.1} parent=1 // pred_check
      _
    $region43: #{tpu_custom_call.1} parent=1 // pred_check_branch
      %655 = sbr.rel (0) target = $region45
    $region44: #{tpu_custom_call.1} parent=1 // pred_region
      %656 = dma.done [#allocation3], 256
    $region45: #{tpu_custom_call.1} parent=1 // pred_fallthru
      _
    %657 = vsyncpa [#allocation3], 1

</llo_original>
